<compile_context>
chip_gen: v7x
topology: tpu7x:2x2x1
jax: 0.10.0
libtpu: 0.0.40
codegen_flags: <defaults>
</compile_context>

<pallas_src>
import math

import jax
import jax.numpy as jnp
from jax.experimental import pallas as pl
from jax.experimental.pallas import tpu as pltpu

# Small, module-consistent synthetic shapes
BATCH = 2      # samples_num
C_IN = 32      # stands in for middim[b] = 1280
FREQ = 4       # freq bins after the backbone (AvgPool2d((4,1)) collapses them to 1)
TIME = 8       # time steps after the backbone
LABEL = 16     # stands in for label_dim = 527
HEADS = 4      # head_num (default) -> MHeadAttention branch
EPS = 1e-7
LANE = 128


def _round_up(x, m):
    return (x + m - 1) // m * m


def mhead_attention_kernel(feat_ref, w_ref, b_ref, hw_ref, out_ref):
    """One grid step = one batch tile; all heads + att/cla fused into one matmul."""
    bn, t, c = feat_ref.shape
    f2 = w_ref.shape[1]          # 2 * H * Lpad
    hl = hw_ref.shape[1]         # H * Lpad
    lp = out_ref.shape[-1]       # Lpad
    n_heads = hl // lp

    # Fused 1x1 convs for every head (att & cla) in a single MXU call, f32 accumulate.
    x2d = feat_ref[...].reshape(bn * t, c)                       # bf16
    z = jnp.dot(x2d, w_ref[...], preferred_element_type=jnp.float32)
    z = jax.nn.sigmoid(z + b_ref[...])                           # f32, (bn*t, 2*H*Lp)
    z = z.reshape(bn, t, f2)

    att = jnp.clip(z[:, :, :hl], EPS, 1.0 - EPS)                 # (bn, t, H*Lp)
    cla = z[:, :, hl:]                                           # (bn, t, H*Lp)

    # Normalize attention over time (EUP reciprocal) and pool over time.
    inv = pl.reciprocal(jnp.sum(att, axis=1, keepdims=True), approx=True)
    pooled = jnp.sum(att * inv * cla, axis=1)                    # (bn, H*Lp)

    # Head-weighted combine: hw_ref holds head_weight[h] broadcast over its Lp block.
    weighted = pooled * hw_ref[...]                              # (bn, H*Lp)
    acc = weighted[:, 0:lp]
    for h in range(1, n_heads):                                  # static, H-1 adds
        acc = acc + weighted[:, h * lp:(h + 1) * lp]
    out_ref[...] = acc.reshape(bn, 1, lp)


def effnet_attention_forward(feat_nchw, params, *, batch_tile=1):
    """feat_nchw: (N, C, Hf, T) = effnet.extract_features output (NCHW)."""
    n, c, hf, t = feat_nchw.shape
    heads, _, label = params["wa"].shape
    lp = _round_up(label, LANE)
    assert n % batch_tile == 0

    # AvgPool2d((4,1)) == mean over the (full) freq axis; done before the transpose so
    # the kernel never stages the 4-D feature map.
    # TODO(synk): assumes Hf equals the pool window (4), as in the original model.
    feat = jnp.mean(feat_nchw, axis=2)                           # (N, C, T), f32
    feat = jnp.transpose(feat, (0, 2, 1)).astype(jnp.bfloat16)   # (N, T, C), bf16

    # Fuse all heads' att+cla 1x1-conv weights into one lane-dense (C, 2*H*Lp) matrix.
    wpad = ((0, 0), (0, 0), (0, lp - label))
    wa = jnp.transpose(jnp.pad(params["wa"], wpad), (1, 0, 2)).reshape(c, heads * lp)
    wc = jnp.transpose(jnp.pad(params["wc"], wpad), (1, 0, 2)).reshape(c, heads * lp)
    w_fused = jnp.concatenate([wa, wc], axis=1).astype(jnp.bfloat16)   # (C, 2*H*Lp)

    bpad = ((0, 0), (0, lp - label))
    ba = jnp.pad(params["ba"], bpad).reshape(1, heads * lp)
    bc = jnp.pad(params["bc"], bpad).reshape(1, heads * lp)
    b_fused = jnp.concatenate([ba, bc], axis=1)                  # (1, 2*H*Lp), f32
    hw_vec = jnp.repeat(params["hw"], lp)[None, :]               # (1, H*Lp),   f32

    f2 = 2 * heads * lp
    out = pl.pallas_call(
        mhead_attention_kernel,
        out_shape=jax.ShapeDtypeStruct((n, 1, lp), jnp.float32),
        grid_spec=pltpu.PrefetchScalarGridSpec(
            num_scalar_prefetch=0,
            grid=(n // batch_tile,),
            in_specs=[
                pl.BlockSpec((batch_tile, t, c), lambda i: (i, 0, 0)),   # features
                pl.BlockSpec((c, f2), lambda i: (0, 0)),                 # fused weights
                pl.BlockSpec((1, f2), lambda i: (0, 0)),                 # fused biases
                pl.BlockSpec((1, heads * lp), lambda i: (0, 0)),         # head weights
            ],
            out_specs=pl.BlockSpec((batch_tile, 1, lp), lambda i: (i, 0, 0)),
        ),
        compiler_params=pltpu.CompilerParams(
            dimension_semantics=("parallel",)),
    )(feat, w_fused, b_fused, hw_vec)

    return out.reshape(n, lp)[:, :label]                         # strip label padding


def init_params(key, c_in, label, heads):
    # PyTorch conv weights are (L, C, 1, 1); we store the transposed (C, L) per head so
    # no in-kernel transpose is needed. init_layer: uniform(+-sqrt(2/n)*sqrt(3)), bias 0.
    n = c_in  # n_in * kh * kw for a 1x1 conv
    scale = math.sqrt(2.0 / n) * math.sqrt(3.0)
    k1, k2 = jax.random.split(key)
    wa = jax.random.uniform(k1, (heads, c_in, label), jnp.float32, -scale, scale)
    wc = jax.random.uniform(k2, (heads, c_in, label), jnp.float32, -scale, scale)
    ba = jnp.zeros((heads, label), jnp.float32)
    bc = jnp.zeros((heads, label), jnp.float32)
    hw = jnp.full((heads,), 1.0 / heads, jnp.float32)            # head_weight param
    return dict(wa=wa, ba=ba, wc=wc, bc=bc, hw=hw)


def reference_forward(feat_nchw, params):
    # Pure-JAX reference of the same forward (same bf16 matmul-input policy).
    feat = jnp.mean(feat_nchw, axis=2)                           # (N, C, T)
    feat = jnp.transpose(feat, (0, 2, 1)).astype(jnp.bfloat16)   # (N, T, C)
    heads, _, label = params["wa"].shape
    out = jnp.zeros((feat.shape[0], label), jnp.float32)
    for h in range(heads):
        wa = params["wa"][h].astype(jnp.bfloat16)
        wc = params["wc"][h].astype(jnp.bfloat16)
        att = jax.nn.sigmoid(
            jnp.dot(feat, wa, preferred_element_type=jnp.float32) + params["ba"][h])
        cla = jax.nn.sigmoid(
            jnp.dot(feat, wc, preferred_element_type=jnp.float32) + params["bc"][h])
        att = jnp.clip(att, EPS, 1.0 - EPS)
        norm_att = att / jnp.sum(att, axis=1, keepdims=True)
        out = out + jnp.sum(norm_att * cla, axis=1) * params["hw"][h]
    return out


if __name__ == "__main__":
    key = jax.random.PRNGKey(0)
    pkey, xkey = jax.random.split(key)

    params = init_params(pkey, C_IN, LABEL, HEADS)

    # Stands in for the output of effnet.extract_features (NCHW feature map).
    feat = jax.random.normal(xkey, (BATCH, C_IN, FREQ, TIME), jnp.float32)

    out = effnet_attention_forward(feat, params)
    out = jax.block_until_ready(out)

    ref = reference_forward(feat, params)
    assert out.shape == (BATCH, LABEL)
    assert bool(jnp.allclose(out, ref, rtol=1e-2, atol=1e-2)), "mismatch vs reference"

    print("KERNEL_OK")
</pallas_src>

<mosaic_0001>
module attributes {stable_mosaic.version = 11 : i64} {
  func.func @mhead_attention_kernel(%arg0: i32, %arg1: memref<1x8x32xbf16, #tpu.memory_space<vmem>>, %arg2: memref<32x1024xbf16, #tpu.memory_space<vmem>>, %arg3: memref<1x1024xf32, #tpu.memory_space<vmem>>, %arg4: memref<1x512xf32, #tpu.memory_space<vmem>>, %arg5: memref<1x1x128xf32, #tpu.memory_space<vmem>>) attributes {dimension_semantics = [#tpu.dimension_semantics<parallel>], iteration_bounds = array<i64: 2>, scalar_prefetch = 0 : i64, scratch_operands = 0 : i64, tpu.core_type = #tpu.core_type<tc>, window_params = [{transform_indices = @transform_0, window_bounds = array<i64: 1, 8, 32>}, {pipeline_mode = #tpu.pipeline_mode<synchronous>, transform_indices = @transform_1, window_bounds = array<i64: 32, 1024>}, {pipeline_mode = #tpu.pipeline_mode<synchronous>, transform_indices = @transform_2, window_bounds = array<i64: 1, 1024>}, {pipeline_mode = #tpu.pipeline_mode<synchronous>, transform_indices = @transform_3, window_bounds = array<i64: 1, 512>}, {transform_indices = @transform_4, window_bounds = array<i64: 1, 1, 128>}]} {
    %c0 = arith.constant 0 : index
    %c0_0 = arith.constant 0 : index
    %c0_1 = arith.constant 0 : index
    %0 = vector.load %arg1[%c0, %c0_0, %c0_1] : memref<1x8x32xbf16, #tpu.memory_space<vmem>>, vector<1x8x32xbf16>
    %1 = vector.shape_cast %0 : vector<1x8x32xbf16> to vector<8x32xbf16>
    %c0_2 = arith.constant 0 : index
    %c0_3 = arith.constant 0 : index
    %2 = vector.load %arg2[%c0_2, %c0_3] : memref<32x1024xbf16, #tpu.memory_space<vmem>>, vector<32x1024xbf16>
    %cst = arith.constant dense<0.000000e+00> : vector<8x1024xf32>
    %3 = tpu.matmul %1, %2, %cst {dimension_numbers = #tpu.dot_dimension_numbers<[1], [0], [0], [1], [0, 0, 1, 1], [], []>} : vector<8x32xbf16>, vector<32x1024xbf16>, vector<8x1024xf32> -> vector<8x1024xf32>
    %c0_4 = arith.constant 0 : index
    %c0_5 = arith.constant 0 : index
    %4 = vector.load %arg3[%c0_4, %c0_5] : memref<1x1024xf32, #tpu.memory_space<vmem>>, vector<1x1024xf32>
    %5 = vector.broadcast %4 : vector<1x1024xf32> to vector<8x1024xf32>
    %6 = arith.addf %3, %5 : vector<8x1024xf32>
    %7 = arith.negf %6 : vector<8x1024xf32>
    %8 = math.exp %7 : vector<8x1024xf32>
    %cst_6 = arith.constant 1.000000e+00 : f32
    %9 = vector.broadcast %cst_6 : f32 to vector<8x1024xf32>
    %10 = arith.addf %9, %8 : vector<8x1024xf32>
    %11 = arith.divf %9, %10 : vector<8x1024xf32>
    %12 = vector.shape_cast %11 : vector<8x1024xf32> to vector<1x8x1024xf32>
    %13 = vector.extract_strided_slice %12 {offsets = [0, 0, 0], sizes = [1, 8, 512], strides = [1, 1, 1]} : vector<1x8x1024xf32> to vector<1x8x512xf32>
    %cst_7 = arith.constant 1.000000e-07 : f32
    %cst_8 = arith.constant 0.99999988 : f32
    %14 = vector.broadcast %cst_7 : f32 to vector<1x8x512xf32>
    %15 = arith.maximumf %14, %13 : vector<1x8x512xf32>
    %16 = vector.broadcast %cst_8 : f32 to vector<1x8x512xf32>
    %17 = arith.minimumf %16, %15 : vector<1x8x512xf32>
    %18 = vector.extract_strided_slice %12 {offsets = [0, 0, 512], sizes = [1, 8, 512], strides = [1, 1, 1]} : vector<1x8x1024xf32> to vector<1x8x512xf32>
    %cst_9 = arith.constant dense<0.000000e+00> : vector<1x512xf32>
    %19 = vector.multi_reduction <add>, %17, %cst_9 [1] : vector<1x8x512xf32> to vector<1x512xf32>
    %20 = vector.shape_cast %19 : vector<1x512xf32> to vector<1x1x512xf32>
    %21 = tpu.reciprocal %20 {approx = true} : vector<1x1x512xf32> -> vector<1x1x512xf32>
    %22 = vector.broadcast %21 : vector<1x1x512xf32> to vector<1x8x512xf32>
    %23 = arith.mulf %17, %22 : vector<1x8x512xf32>
    %24 = arith.mulf %23, %18 : vector<1x8x512xf32>
    %cst_10 = arith.constant dense<0.000000e+00> : vector<1x512xf32>
    %25 = vector.multi_reduction <add>, %24, %cst_10 [1] : vector<1x8x512xf32> to vector<1x512xf32>
    %c0_11 = arith.constant 0 : index
    %c0_12 = arith.constant 0 : index
    %26 = vector.load %arg4[%c0_11, %c0_12] : memref<1x512xf32, #tpu.memory_space<vmem>>, vector<1x512xf32>
    %27 = arith.mulf %25, %26 : vector<1x512xf32>
    %28 = vector.extract_strided_slice %27 {offsets = [0, 0], sizes = [1, 128], strides = [1, 1]} : vector<1x512xf32> to vector<1x128xf32>
    %29 = vector.extract_strided_slice %27 {offsets = [0, 128], sizes = [1, 128], strides = [1, 1]} : vector<1x512xf32> to vector<1x128xf32>
    %30 = arith.addf %28, %29 : vector<1x128xf32>
    %31 = vector.extract_strided_slice %27 {offsets = [0, 256], sizes = [1, 128], strides = [1, 1]} : vector<1x512xf32> to vector<1x128xf32>
    %32 = arith.addf %30, %31 : vector<1x128xf32>
    %33 = vector.extract_strided_slice %27 {offsets = [0, 384], sizes = [1, 128], strides = [1, 1]} : vector<1x512xf32> to vector<1x128xf32>
    %34 = arith.addf %32, %33 : vector<1x128xf32>
    %35 = vector.shape_cast %34 : vector<1x128xf32> to vector<1x1x128xf32>
    %c0_13 = arith.constant 0 : index
    %c0_14 = arith.constant 0 : index
    %c0_15 = arith.constant 0 : index
    %36 = vector.load %arg5[%c0_13, %c0_14, %c0_15] : memref<1x1x128xf32, #tpu.memory_space<vmem>>, vector<1x1x128xf32>
    tpu.vector_store %arg5[%c0_13, %c0_14, %c0_15], %35 {strides = array<i32>} : memref<1x1x128xf32, #tpu.memory_space<vmem>>, vector<1x1x128xf32>,
    return
  }
  func.func @transform_0(%arg0: i32) -> (i32, i32, i32) {
    %c0_i32 = arith.constant 0 : i32
    %c0_i32_0 = arith.constant 0 : i32
    %c0_i32_1 = arith.constant 0 : i32
    return %arg0, %c0_i32, %c0_i32_0 : i32, i32, i32
  }
  func.func @transform_1(%arg0: i32) -> (i32, i32) {
    %c0_i32 = arith.constant 0 : i32
    %c0_i32_0 = arith.constant 0 : i32
    %c0_i32_1 = arith.constant 0 : i32
    return %c0_i32, %c0_i32_0 : i32, i32
  }
  func.func @transform_2(%arg0: i32) -> (i32, i32) {
    %c0_i32 = arith.constant 0 : i32
    %c0_i32_0 = arith.constant 0 : i32
    %c0_i32_1 = arith.constant 0 : i32
    return %c0_i32, %c0_i32_0 : i32, i32
  }
  func.func @transform_3(%arg0: i32) -> (i32, i32) {
    %c0_i32 = arith.constant 0 : i32
    %c0_i32_0 = arith.constant 0 : i32
    %c0_i32_1 = arith.constant 0 : i32
    return %c0_i32, %c0_i32_0 : i32, i32
  }
  func.func @transform_4(%arg0: i32) -> (i32, i32, i32) {
    %c0_i32 = arith.constant 0 : i32
    %c0_i32_0 = arith.constant 0 : i32
    %c0_i32_1 = arith.constant 0 : i32
    return %arg0, %c0_i32, %c0_i32_0 : i32, i32, i32
  }
}

</mosaic_0001>

<llo_original>
// kernel: tpu_custom_call.1
$region0: #{tpu_custom_call.1}
  #allocation0 [shape = 'u32[]', space=smem, size = 0x4, offset = 0x4, fixed_abs, tag = 'smem constant byte address 0x4 - core index']
  #allocation1 [shape = 'u32[144,128]{1,0:T(1,128)}', space=vmem, size = 0x12000, scoped, tag = 'internal scratch']
  %s0 = inlined_call_operand.hbm [shape: bf16[2,8,32], index: 0, kind: input, shape index: {}]
  %s1 = inlined_call_operand.hbm [shape: bf16[32,1024], index: 1, kind: input, shape index: {}]
  %s2 = inlined_call_operand.hbm [shape: f32[1,1024], index: 2, kind: input, shape index: {}]
  %s3 = inlined_call_operand.vmem [shape: f32[1,512], index: 3, kind: input, shape index: {}]
  %s4 = inlined_call_operand.hbm [shape: f32[2,1,128], index: 4, kind: output, shape index: {}]
  %s5 = sld [smem:[#allocation0]]
  $region61: #{tpu_custom_call.1} parent=0
    _
  %s7 = ssub.s32 1, %s5
  %s8 = scalar_select 0, %s7, %s5
  $region1: #{tpu_custom_call.1} parent=0
    #allocation2 [shape = 'u8[4096]{0}', space=vmem, size = 0x1000, scoped, tag = 'input window, operand 0']
    #allocation3 [shape = 's32[2]{0}', space=sflag, size = 0x8, scoped, tag = 'scoped memory for tpu_custom_call.1']
    #allocation4 [shape = 's32[2]{0}', space=sflag, size = 0x8, scoped, tag = 'scoped memory for tpu_custom_call.1']
    #allocation5 [shape = 'u8[65536]{0}', space=vmem, size = 0x10000, scoped, tag = 'input window, operand 1, single buffered']
    #allocation6 [shape = 's32[1]{0}', space=sflag, size = 0x4, scoped, tag = 'scoped memory for tpu_custom_call.1']
    #allocation7 [shape = 'u8[4096]{0}', space=vmem, size = 0x1000, scoped, tag = 'input window, operand 2, single buffered']
    #allocation8 [shape = 'u8[1024]{0}', space=vmem, size = 0x400, scoped, tag = 'output window, operand 0']
    %9 = vsyncpa [#allocation3], 0
    %s10 = scalar_lea.sflag [#allocation3], 1
    %11 = vsyncpa %s10, 0
    %12 = vsyncpa [#allocation6], 0
    %13 = vsyncpa [#allocation4], 0
    %s14 = scalar_lea.sflag [#allocation4], 1
    %15 = vsyncpa %s14, 0
    loop: start=0, step=1, limit=4
    $region2: #{tpu_custom_call.1} parent=1 // loop_pre_header
      _
    $region3: #{tpu_custom_call.1} parent=1 // loop_header
      %s17 = sphi 0, %s21
      %p18 = scmp.ge.s32.totalorder %s17, 4
      %s27 = sphi 0, %s29
      %s30 = sphi 0, %s27
      %s31 = sphi 0, %s30
      %s47 = sphi 0, %s31
      %s51 = sphi 0, %s51
      %s53 = sphi 0, %s51
      %s54 = sphi 0, %s53
      %s68 = sphi 0, %s54
      %s72 = sphi 0, %s72
      %s74 = sphi 0, %s72
      %s75 = sphi 0, %s74
      %s89 = sphi 0, %s75
      %s93 = sphi 0, %s93
      %s95 = sphi 0, %s93
      %s96 = sphi 0, %s95
      %s110 = sphi 0, %s96
      %s116 = sphi 0, %s118
      %s119 = sphi 0, %s116
      %s120 = sphi 0, %s119
      %s136 = sphi 0, %s120
    $region4: #{tpu_custom_call.1} parent=1 // loop_header_branch
      %20 = sbr.rel (%p18) target = $region8
    $region5: #{tpu_custom_call.1} parent=1 // loop_body
      %s22 = ssub.s32 %s17, 1
      %s23 = ssub.s32 %s17, 2
      %s24 = sadd.s32 %s17, 1
      %s25 = ssub.s32 %s17, %s24
      %p26 = scmp.eq.s32.totalorder %s25, 0
      %s28 = sadd.s32 %s27, 1
      %s29 = scalar_select %p26, %s27, %s28
      %p32 = pneg %p26
      %p33 = scmp.eq.s32.totalorder %s17, 1
      %p34 = por %p32, %p33
      %p35 = scmp.ne.s32.totalorder %s27, %s30
      %p36 = scmp.eq.s32.totalorder %s17, 0
      %p37 = por %p35, %p36
      %p38 = scmp.ne.s32.totalorder %s27, %s30
      %p39 = scmp.eq.s32.totalorder %s22, 1
      %p40 = por %p38, %p39
      %p41 = scmp.ne.s32.totalorder %s30, %s31
      %p42 = scmp.eq.s32.totalorder %s22, 0
      %p43 = por %p41, %p42
      %p44 = scmp.ne.s32.totalorder %s30, %s31
      %p45 = scmp.eq.s32.totalorder %s23, 1
      %p46 = por %p44, %p45
      %p48 = scmp.ne.s32.totalorder %s31, %s47
      %p49 = scmp.eq.s32.totalorder %s23, 0
      %p50 = por %p48, %p49
      %s52 = sadd.s32 %s51, 1
      %p55 = scmp.eq.s32.totalorder %s17, 1
      %p56 = scmp.ne.s32.totalorder %s51, %s53
      %p57 = scmp.eq.s32.totalorder %s17, 0
      %p58 = por %p56, %p57
      %p59 = scmp.ne.s32.totalorder %s51, %s53
      %p60 = scmp.eq.s32.totalorder %s22, 1
      %p61 = por %p59, %p60
      %p62 = scmp.ne.s32.totalorder %s53, %s54
      %p63 = scmp.eq.s32.totalorder %s22, 0
      %p64 = por %p62, %p63
      %p65 = scmp.ne.s32.totalorder %s53, %s54
      %p66 = scmp.eq.s32.totalorder %s23, 1
      %p67 = por %p65, %p66
      %p69 = scmp.ne.s32.totalorder %s54, %s68
      %p70 = scmp.eq.s32.totalorder %s23, 0
      %p71 = por %p69, %p70
      %s73 = sadd.s32 %s72, 1
      %p76 = scmp.eq.s32.totalorder %s17, 1
      %p77 = scmp.ne.s32.totalorder %s72, %s74
      %p78 = scmp.eq.s32.totalorder %s17, 0
      %p79 = por %p77, %p78
      %p80 = scmp.ne.s32.totalorder %s72, %s74
      %p81 = scmp.eq.s32.totalorder %s22, 1
      %p82 = por %p80, %p81
      %p83 = scmp.ne.s32.totalorder %s74, %s75
      %p84 = scmp.eq.s32.totalorder %s22, 0
      %p85 = por %p83, %p84
      %p86 = scmp.ne.s32.totalorder %s74, %s75
      %p87 = scmp.eq.s32.totalorder %s23, 1
      %p88 = por %p86, %p87
      %p90 = scmp.ne.s32.totalorder %s75, %s89
      %p91 = scmp.eq.s32.totalorder %s23, 0
      %p92 = por %p90, %p91
      %s94 = sadd.s32 %s93, 1
      %p97 = scmp.eq.s32.totalorder %s17, 1
      %p98 = scmp.ne.s32.totalorder %s93, %s95
      %p99 = scmp.eq.s32.totalorder %s17, 0
      %p100 = por %p98, %p99
      %p101 = scmp.ne.s32.totalorder %s93, %s95
      %p102 = scmp.eq.s32.totalorder %s22, 1
      %p103 = por %p101, %p102
      %p104 = scmp.ne.s32.totalorder %s95, %s96
      %p105 = scmp.eq.s32.totalorder %s22, 0
      %p106 = por %p104, %p105
      %p107 = scmp.ne.s32.totalorder %s95, %s96
      %p108 = scmp.eq.s32.totalorder %s23, 1
      %p109 = por %p107, %p108
      %p111 = scmp.ne.s32.totalorder %s96, %s110
      %p112 = scmp.eq.s32.totalorder %s23, 0
      %p113 = por %p111, %p112
      %s114 = ssub.s32 %s17, %s24
      %p115 = scmp.eq.s32.totalorder %s114, 0
      %s117 = sadd.s32 %s116, 1
      %s118 = scalar_select %p115, %s116, %s117
      %p121 = pneg %p115
      %p122 = scmp.eq.s32.totalorder %s17, 1
      %p123 = por %p121, %p122
      %p124 = scmp.ne.s32.totalorder %s116, %s119
      %p125 = scmp.eq.s32.totalorder %s17, 0
      %p126 = por %p124, %p125
      %p127 = scmp.ne.s32.totalorder %s116, %s119
      %p128 = scmp.eq.s32.totalorder %s22, 1
      %p129 = por %p127, %p128
      %p130 = scmp.ne.s32.totalorder %s119, %s120
      %p131 = scmp.eq.s32.totalorder %s22, 0
      %p132 = por %p130, %p131
      %p133 = scmp.ne.s32.totalorder %s119, %s120
      %p134 = scmp.eq.s32.totalorder %s23, 1
      %p135 = por %p133, %p134
      %p137 = scmp.ne.s32.totalorder %s120, %s136
      %p138 = scmp.eq.s32.totalorder %s23, 0
      %p139 = por %p137, %p138
      %p140 = scmp.le.s32.totalorder 1, %s17
      %p141 = scmp.lt.s32.totalorder %s17, 3
      %p142 = pnand %p140, %p141
      %p143 = pneg %p142
      // Predicated region
      $region9: #{tpu_custom_call.1} parent=5 // pred_check
        _
      $region10: #{tpu_custom_call.1} parent=5 // pred_check_branch
        %145 = sbr.rel (%p142) target = $region12
      $region11: #{tpu_custom_call.1} parent=5 // pred_region
        %s146 = ssub.s32 %s17, 1
        // Predicated region
        $region13: #{tpu_custom_call.1} parent=11 // pred_check
          %p147 = pneg %p64
        $region14: #{tpu_custom_call.1} parent=11 // pred_check_branch
          %149 = sbr.rel (%p147) target = $region16
        $region15: #{tpu_custom_call.1} parent=11 // pred_region
          %s151 = ssub.s32 2048, 2048
          %152 = vsyncadd [#allocation6], %s151
          %s153 = sshll.u32 [#allocation5], 4
          %s154 = int_to_ptr.vmem [resolvable:$true] %s153
          %159 = dma.hbm_to_vmem [thread:$0]  %s1, 2048, %s154, [#allocation6], 512, 512, 32
        $region16: #{tpu_custom_call.1} parent=11 // pred_fallthru
          _
        // Predicated region
        $region17: #{tpu_custom_call.1} parent=11 // pred_check
          %p160 = pneg %p85
        $region18: #{tpu_custom_call.1} parent=11 // pred_check_branch
          %162 = sbr.rel (%p160) target = $region20
        $region19: #{tpu_custom_call.1} parent=11 // pred_region
          %s164 = ssub.s32 128, 128
          %165 = vsyncadd [#allocation6], %s164
          %s167 = sshll.u32 [#allocation7], 4
          %s168 = int_to_ptr.vmem [resolvable:$true] %s167
          %170 = dma.hbm_to_vmem [thread:$0]  %s2, 128, %s168, [#allocation6]
        $region20: #{tpu_custom_call.1} parent=11 // pred_fallthru
          _
        // Predicated region
        $region21: #{tpu_custom_call.1} parent=11 // pred_check
          %p171 = pneg %p106
        $region22: #{tpu_custom_call.1} parent=11 // pred_check_branch
          %173 = sbr.rel (%p171) target = $region24
        $region23: #{tpu_custom_call.1} parent=11 // pred_region
          _
        $region24: #{tpu_custom_call.1} parent=11 // pred_fallthru
          _
      $region12: #{tpu_custom_call.1} parent=5 // pred_fallthru
        _
      %p174 = scmp.lt.s32.totalorder %s17, 2
      // Predicated region
      $region25: #{tpu_custom_call.1} parent=5 // pred_check
        %p175 = pneg %p174
      $region26: #{tpu_custom_call.1} parent=5 // pred_check_branch
        %177 = sbr.rel (%p175) target = $region28
      $region27: #{tpu_custom_call.1} parent=5 // pred_region
        // Predicated region
        $region29: #{tpu_custom_call.1} parent=27 // pred_check
          %p178 = pneg %p37
        $region30: #{tpu_custom_call.1} parent=27 // pred_check_branch
          %180 = sbr.rel (%p178) target = $region32
        $region31: #{tpu_custom_call.1} parent=27 // pred_region
          %s181 = sand.u32 %s27, 1
          %s182 = scalar_lea.sflag [#allocation3], %s181
          %s183 = sand.u32 %s27, 1
          %s184 = smul.addr %s183, 4
          %s185 = scalar_lea.vmem [#allocation2], %s184
          %s187 = ssub.s32 64, 64
          %188 = vsyncadd %s182, %s187
          %s189 = smul.addr %s17, 64
          %s190 = scalar_lea.hbm %s0, %s189
          %s192 = sshll.u32 %s185, 4
          %s193 = int_to_ptr.vmem [resolvable:$true] %s192
          %195 = dma.hbm_to_vmem [thread:$0]  %s190, 64, %s193, %s182
        $region32: #{tpu_custom_call.1} parent=27 // pred_fallthru
          _
      $region28: #{tpu_custom_call.1} parent=5 // pred_fallthru
        _
      %p196 = scmp.le.s32.totalorder 1, %s17
      %p197 = scmp.lt.s32.totalorder %s17, 3
      %p198 = pnand %p196, %p197
      %p199 = pneg %p198
      // Predicated region
      $region33: #{tpu_custom_call.1} parent=5 // pred_check
        _
      $region34: #{tpu_custom_call.1} parent=5 // pred_check_branch
        %201 = sbr.rel (%p198) target = $region36
      $region35: #{tpu_custom_call.1} parent=5 // pred_region
        %s202 = ssub.s32 %s17, 1
        %s203 = sand.u32 %s30, 1
        %s204 = scalar_lea.sflag [#allocation3], %s203
        %s205 = sand.u32 %s30, 1
        %s206 = smul.addr %s205, 4
        %s207 = scalar_lea.vmem [#allocation2], %s206
        // Predicated region
        $region37: #{tpu_custom_call.1} parent=35 // pred_check
          %p208 = pneg %p43
        $region38: #{tpu_custom_call.1} parent=35 // pred_check_branch
          %210 = sbr.rel (%p208) target = $region40
        $region39: #{tpu_custom_call.1} parent=35 // pred_region
          %211 = dma.done %s204, 64
        $region40: #{tpu_custom_call.1} parent=35 // pred_fallthru
          _
        // Predicated region
        $region41: #{tpu_custom_call.1} parent=35 // pred_check
          %p212 = pneg %p64
        $region42: #{tpu_custom_call.1} parent=35 // pred_check_branch
          %214 = sbr.rel (%p212) target = $region44
        $region43: #{tpu_custom_call.1} parent=35 // pred_region
          %215 = dma.done [#allocation6], 2048
        $region44: #{tpu_custom_call.1} parent=35 // pred_fallthru
          _
        // Predicated region
        $region45: #{tpu_custom_call.1} parent=35 // pred_check
          %p216 = pneg %p85
        $region46: #{tpu_custom_call.1} parent=35 // pred_check_branch
          %218 = sbr.rel (%p216) target = $region48
        $region47: #{tpu_custom_call.1} parent=35 // pred_region
          %219 = dma.done [#allocation6], 128
        $region48: #{tpu_custom_call.1} parent=35 // pred_fallthru
          _
        %s220 = sand.u32 %s30, 1
        %s221 = scalar_lea.sflag [#allocation3], %s220
        %s222 = sand.u32 %s30, 1
        %s223 = smul.addr %s222, 4
        %s224 = scalar_lea.vmem [#allocation2], %s223
        %p225 = pneg %p43
        %p226 = pneg %p40
        %p227 = pneg %p64
        %p228 = pneg %p61
        %p229 = pneg %p85
        %p230 = pneg %p82
        %p231 = pneg %p106
        %p232 = pneg %p103
        %p233 = pneg %p132
        %p234 = pneg %p129
        %s235 = sand.u32 %s119, 1
        %s236 = scalar_lea.sflag [#allocation4], %s235
        %s237 = sand.u32 %s119, 1
        %s238 = scalar_lea.vmem [#allocation8], %s237
        %v240 = vld [vmem:[%s207] sm:$0xf]
        %v241 = vld [vmem:[#allocation5] sm:$0xff]
        %v242 = vld [vmem:[#allocation5 + $0x8] sm:$0xff]
        %v243 = vld [vmem:[#allocation5 + $0x10] sm:$0xff]
        %v244 = vld [vmem:[#allocation5 + $0x18] sm:$0xff]
        %v245 = vld [vmem:[#allocation5 + $0x20] sm:$0xff]
        %v246 = vld [vmem:[#allocation5 + $0x28] sm:$0xff]
        %v247 = vld [vmem:[#allocation5 + $0x30] sm:$0xff]
        %v248 = vld [vmem:[#allocation5 + $0x38] sm:$0xff]
        %v249 = vld [vmem:[#allocation5 + $0x40] sm:$0xff]
        %v250 = vld [vmem:[#allocation5 + $0x48] sm:$0xff]
        %v251 = vld [vmem:[#allocation5 + $0x50] sm:$0xff]
        %v252 = vld [vmem:[#allocation5 + $0x58] sm:$0xff]
        %v253 = vld [vmem:[#allocation5 + $0x60] sm:$0xff]
        %v254 = vld [vmem:[#allocation5 + $0x68] sm:$0xff]
        %v255 = vld [vmem:[#allocation5 + $0x70] sm:$0xff]
        %v256 = vld [vmem:[#allocation5 + $0x78] sm:$0xff]
        %v257 = vld [vmem:[#allocation7] sm:$0xff]
        %v259 = vlaneseq
        %v260 = vshrl.u32 %v259, 7
        %v261 = vsub.s32 0, %v260
        %v262 = vrot.slane %v257, %v261
        %v263 = vlaneseq
        %v264 = vshrl.u32 %v263, 7
        %v265 = vsub.s32 1, %v264
        %v266 = vrot.slane %v257, %v265
        %v267 = vlaneseq
        %v268 = vshrl.u32 %v267, 7
        %v269 = vsub.s32 2, %v268
        %v270 = vrot.slane %v257, %v269
        %v271 = vlaneseq
        %v272 = vshrl.u32 %v271, 7
        %v273 = vsub.s32 3, %v272
        %v274 = vrot.slane %v257, %v273
        %v275 = vlaneseq
        %v276 = vshrl.u32 %v275, 7
        %v277 = vsub.s32 4, %v276
        %v278 = vrot.slane %v257, %v277
        %v279 = vlaneseq
        %v280 = vshrl.u32 %v279, 7
        %v281 = vsub.s32 5, %v280
        %v282 = vrot.slane %v257, %v281
        %v283 = vlaneseq
        %v284 = vshrl.u32 %v283, 7
        %v285 = vsub.s32 6, %v284
        %v286 = vrot.slane %v257, %v285
        %v287 = vlaneseq
        %v288 = vshrl.u32 %v287, 7
        %v289 = vsub.s32 7, %v288
        %v290 = vrot.slane %v257, %v289
        %v315 = vunpack.c.l.b16 %v241
        %v316 = vunpack.c.h.b16 %v241
        %v317 = vunpack.c.l.b16 %v242
        %v318 = vunpack.c.h.b16 %v242
        %v319 = vunpack.c.l.b16 %v243
        %v320 = vunpack.c.h.b16 %v243
        %v321 = vunpack.c.l.b16 %v244
        %v322 = vunpack.c.h.b16 %v244
        %v323 = vunpack.c.l.b16 %v245
        %v324 = vunpack.c.h.b16 %v245
        %v325 = vunpack.c.l.b16 %v246
        %v326 = vunpack.c.h.b16 %v246
        %v327 = vunpack.c.l.b16 %v247
        %v328 = vunpack.c.h.b16 %v247
        %v329 = vunpack.c.l.b16 %v248
        %v330 = vunpack.c.h.b16 %v248
        %v331 = vunpack.c.l.b16 %v249
        %v332 = vunpack.c.h.b16 %v249
        %v333 = vunpack.c.l.b16 %v250
        %v334 = vunpack.c.h.b16 %v250
        %v335 = vunpack.c.l.b16 %v251
        %v336 = vunpack.c.h.b16 %v251
        %v337 = vunpack.c.l.b16 %v252
        %v338 = vunpack.c.h.b16 %v252
        %v339 = vunpack.c.l.b16 %v253
        %v340 = vunpack.c.h.b16 %v253
        %v341 = vunpack.c.l.b16 %v254
        %v342 = vunpack.c.h.b16 %v254
        %v343 = vunpack.c.l.b16 %v255
        %v344 = vunpack.c.h.b16 %v255
        %v345 = vunpack.c.l.b16 %v256
        %v346 = vunpack.c.h.b16 %v256
        %v347 = vpack.c.b16 %v323, %v315
        %v348 = vpack.c.b16 %v324, %v316
        %v349 = vpack.c.b16 %v325, %v317
        %v350 = vpack.c.b16 %v326, %v318
        %v351 = vpack.c.b16 %v327, %v319
        %v352 = vpack.c.b16 %v328, %v320
        %v353 = vpack.c.b16 %v329, %v321
        %v354 = vpack.c.b16 %v330, %v322
        %v355 = vpack.c.b16 %v339, %v331
        %v356 = vpack.c.b16 %v340, %v332
        %v357 = vpack.c.b16 %v341, %v333
        %v358 = vpack.c.b16 %v342, %v334
        %v359 = vpack.c.b16 %v343, %v335
        %v360 = vpack.c.b16 %v344, %v336
        %v361 = vpack.c.b16 %v345, %v337
        %v362 = vpack.c.b16 %v346, %v338
        %vm379 = vcmask 261120
        %v381 = vsel %vm379, %v240, 0
        %383 = vmatprep.subr.bf16.mxu0 %v348
        %384 = vmatpush1.bf16.msra.mxu0 %v347
        %385 = vmatprep.subr.bf16.mxu0 %v356
        %386 = vmatpush1.bf16.msra.mxu0 %v355
        %387 = vmatprep.subr.bf16.mxu0 0
        %388 = vmatpush1.bf16.msra.mxu0 0
        %389 = vmatprep.subr.bf16.mxu0 0
        %390 = vmatpush1.bf16.msra.mxu0 0
        %391 = vmatprep.subr.bf16.mxu0 0
        %392 = vmatpush1.bf16.msra.mxu0 0
        %393 = vmatprep.subr.bf16.mxu0 0
        %394 = vmatpush1.bf16.msra.mxu0 0
        %395 = vmatprep.subr.bf16.mxu0 0
        %396 = vmatpush1.bf16.msra.mxu0 0
        %397 = vmatprep.subr.bf16.mxu0 0
        %398 = vmatpush1.bf16.msra.mxu0 0
        %399 = vmatprep.subr.bf16.mxu0 0
        %400 = vmatpush1.bf16.msra.mxu0 0
        %401 = vmatprep.subr.bf16.mxu0 0
        %402 = vmatpush1.bf16.msra.mxu0 0
        %403 = vmatprep.subr.bf16.mxu0 0
        %404 = vmatpush1.bf16.msra.mxu0 0
        %405 = vmatprep.subr.bf16.mxu0 0
        %406 = vmatpush1.bf16.msra.mxu0 0
        %407 = vmatprep.subr.bf16.mxu0 0
        %408 = vmatpush1.bf16.msra.mxu0 0
        %409 = vmatprep.subr.bf16.mxu0 0
        %410 = vmatpush1.bf16.msra.mxu0 0
        %411 = vmatprep.subr.bf16.mxu0 0
        %412 = vmatpush1.bf16.msra.mxu0 0
        %413 = vmatprep.subr.bf16.mxu0 0
        %414 = vmatpush1.bf16.msra.mxu0 0
        %415 = vmatprep.mubr.bf16.mxu0 0
        %416 = vmatmul.mubr.bf16.gmra.mrb[0].mxu0 %v381
        %v417 = vpop.f32.mrb[0].mxu0
        %v418 = vadd.f32 %v262, %v417
        %v419 = vpop.f32.mrb[0].mxu0
        %v420 = vadd.f32 %v266, %v419
        %v421 = vpop.f32.mrb[0].mxu0
        %v422 = vpop.f32.mrb[0].mxu0
        %423 = vdwg.mxu0
        %424 = vmatprep.subr.bf16.mxu0 %v350
        %425 = vmatpush1.bf16.msra.mxu0 %v349
        %426 = vmatprep.subr.bf16.mxu0 %v358
        %427 = vmatpush1.bf16.msra.mxu0 %v357
        %428 = vmatprep.subr.bf16.mxu0 0
        %429 = vmatpush1.bf16.msra.mxu0 0
        %430 = vmatprep.subr.bf16.mxu0 0
        %431 = vmatpush1.bf16.msra.mxu0 0
        %432 = vmatprep.subr.bf16.mxu0 0
        %433 = vmatpush1.bf16.msra.mxu0 0
        %434 = vmatprep.subr.bf16.mxu0 0
        %435 = vmatpush1.bf16.msra.mxu0 0
        %436 = vmatprep.subr.bf16.mxu0 0
        %437 = vmatpush1.bf16.msra.mxu0 0
        %438 = vmatprep.subr.bf16.mxu0 0
        %439 = vmatpush1.bf16.msra.mxu0 0
        %440 = vmatprep.subr.bf16.mxu0 0
        %441 = vmatpush1.bf16.msra.mxu0 0
        %442 = vmatprep.subr.bf16.mxu0 0
        %443 = vmatpush1.bf16.msra.mxu0 0
        %444 = vmatprep.subr.bf16.mxu0 0
        %445 = vmatpush1.bf16.msra.mxu0 0
        %446 = vmatprep.subr.bf16.mxu0 0
        %447 = vmatpush1.bf16.msra.mxu0 0
        %448 = vmatprep.subr.bf16.mxu0 0
        %449 = vmatpush1.bf16.msra.mxu0 0
        %450 = vmatprep.subr.bf16.mxu0 0
        %451 = vmatpush1.bf16.msra.mxu0 0
        %452 = vmatprep.subr.bf16.mxu0 0
        %453 = vmatpush1.bf16.msra.mxu0 0
        %454 = vmatprep.subr.bf16.mxu0 0
        %455 = vmatpush1.bf16.msra.mxu0 0
        %456 = vmatprep.mubr.bf16.mxu0 0
        %457 = vmatmul.mubr.bf16.gmra.mrb[0].mxu0 %v381
        %v458 = vpop.f32.mrb[0].mxu0
        %v459 = vadd.f32 %v270, %v458
        %v460 = vpop.f32.mrb[0].mxu0
        %v461 = vadd.f32 %v274, %v460
        %v462 = vpop.f32.mrb[0].mxu0
        %v463 = vpop.f32.mrb[0].mxu0
        %464 = vdwg.mxu0
        %465 = vmatprep.subr.bf16.mxu0 %v352
        %466 = vmatpush1.bf16.msra.mxu0 %v351
        %467 = vmatprep.subr.bf16.mxu0 %v360
        %468 = vmatpush1.bf16.msra.mxu0 %v359
        %469 = vmatprep.subr.bf16.mxu0 0
        %470 = vmatpush1.bf16.msra.mxu0 0
        %471 = vmatprep.subr.bf16.mxu0 0
        %472 = vmatpush1.bf16.msra.mxu0 0
        %473 = vmatprep.subr.bf16.mxu0 0
        %474 = vmatpush1.bf16.msra.mxu0 0
        %475 = vmatprep.subr.bf16.mxu0 0
        %476 = vmatpush1.bf16.msra.mxu0 0
        %477 = vmatprep.subr.bf16.mxu0 0
        %478 = vmatpush1.bf16.msra.mxu0 0
        %479 = vmatprep.subr.bf16.mxu0 0
        %480 = vmatpush1.bf16.msra.mxu0 0
        %481 = vmatprep.subr.bf16.mxu0 0
        %482 = vmatpush1.bf16.msra.mxu0 0
        %483 = vmatprep.subr.bf16.mxu0 0
        %484 = vmatpush1.bf16.msra.mxu0 0
        %485 = vmatprep.subr.bf16.mxu0 0
        %486 = vmatpush1.bf16.msra.mxu0 0
        %487 = vmatprep.subr.bf16.mxu0 0
        %488 = vmatpush1.bf16.msra.mxu0 0
        %489 = vmatprep.subr.bf16.mxu0 0
        %490 = vmatpush1.bf16.msra.mxu0 0
        %491 = vmatprep.subr.bf16.mxu0 0
        %492 = vmatpush1.bf16.msra.mxu0 0
        %493 = vmatprep.subr.bf16.mxu0 0
        %494 = vmatpush1.bf16.msra.mxu0 0
        %495 = vmatprep.subr.bf16.mxu0 0
        %496 = vmatpush1.bf16.msra.mxu0 0
        %497 = vmatprep.mubr.bf16.mxu0 0
        %498 = vmatmul.mubr.bf16.gmra.mrb[0].mxu0 %v381
        %v499 = vpop.f32.mrb[0].mxu0
        %v500 = vadd.f32 %v278, %v499
        %v501 = vpop.f32.mrb[0].mxu0
        %v502 = vadd.f32 %v282, %v501
        %v503 = vpop.f32.mrb[0].mxu0
        %v504 = vpop.f32.mrb[0].mxu0
        %505 = vdwg.mxu0
        %506 = vmatprep.subr.bf16.mxu0 %v354
        %507 = vmatpush1.bf16.msra.mxu0 %v353
        %508 = vmatprep.subr.bf16.mxu0 %v362
        %509 = vmatpush1.bf16.msra.mxu0 %v361
        %510 = vmatprep.subr.bf16.mxu0 0
        %511 = vmatpush1.bf16.msra.mxu0 0
        %512 = vmatprep.subr.bf16.mxu0 0
        %513 = vmatpush1.bf16.msra.mxu0 0
        %514 = vmatprep.subr.bf16.mxu0 0
        %515 = vmatpush1.bf16.msra.mxu0 0
        %516 = vmatprep.subr.bf16.mxu0 0
        %517 = vmatpush1.bf16.msra.mxu0 0
        %518 = vmatprep.subr.bf16.mxu0 0
        %519 = vmatpush1.bf16.msra.mxu0 0
        %520 = vmatprep.subr.bf16.mxu0 0
        %521 = vmatpush1.bf16.msra.mxu0 0
        %522 = vmatprep.subr.bf16.mxu0 0
        %523 = vmatpush1.bf16.msra.mxu0 0
        %524 = vmatprep.subr.bf16.mxu0 0
        %525 = vmatpush1.bf16.msra.mxu0 0
        %526 = vmatprep.subr.bf16.mxu0 0
        %527 = vmatpush1.bf16.msra.mxu0 0
        %528 = vmatprep.subr.bf16.mxu0 0
        %529 = vmatpush1.bf16.msra.mxu0 0
        %530 = vmatprep.subr.bf16.mxu0 0
        %531 = vmatpush1.bf16.msra.mxu0 0
        %532 = vmatprep.subr.bf16.mxu0 0
        %533 = vmatpush1.bf16.msra.mxu0 0
        %534 = vmatprep.subr.bf16.mxu0 0
        %535 = vmatpush1.bf16.msra.mxu0 0
        %536 = vmatprep.subr.bf16.mxu0 0
        %537 = vmatpush1.bf16.msra.mxu0 0
        %538 = vmatprep.mubr.bf16.mxu0 0
        %539 = vmatmul.mubr.bf16.gmra.mrb[0].mxu0 %v381
        %v540 = vpop.f32.mrb[0].mxu0
        %v541 = vadd.f32 %v286, %v540
        %v542 = vpop.f32.mrb[0].mxu0
        %v543 = vadd.f32 %v290, %v542
        %v544 = vpop.f32.mrb[0].mxu0
        %v545 = vpop.f32.mrb[0].mxu0
        %546 = vdwg.mxu0
        %v547 = vxor.u32 %v418, 2147483648
        %v548 = vxor.u32 %v420, 2147483648
        %v549 = vxor.u32 %v459, 2147483648
        %v550 = vxor.u32 %v461, 2147483648
        %v551 = vxor.u32 %v500, 2147483648
        %v552 = vxor.u32 %v502, 2147483648
        %v553 = vxor.u32 %v541, 2147483648
        %v554 = vxor.u32 %v543, 2147483648
        %v555 = vmul.f32 %v547, 1.442695
        %v556 = vpow.pop %v555
        %v557 = vmul.f32 %v548, 1.442695
        %v558 = vpow.pop %v557
        %v559 = vmul.f32 %v549, 1.442695
        %v560 = vpow.pop %v559
        %v561 = vmul.f32 %v550, 1.442695
        %v562 = vpow.pop %v561
        %v563 = vmul.f32 %v551, 1.442695
        %v564 = vpow.pop %v563
        %v565 = vmul.f32 %v552, 1.442695
        %v566 = vpow.pop %v565
        %v567 = vmul.f32 %v553, 1.442695
        %v568 = vpow.pop %v567
        %v569 = vmul.f32 %v554, 1.442695
        %v570 = vpow.pop %v569
        %v571 = vadd.f32 %v556, 1.0
        %v572 = vadd.f32 %v558, 1.0
        %v573 = vadd.f32 %v560, 1.0
        %v574 = vadd.f32 %v562, 1.0
        %v575 = vadd.f32 %v564, 1.0
        %v576 = vadd.f32 %v566, 1.0
        %v577 = vadd.f32 %v568, 1.0
        %v578 = vadd.f32 %v570, 1.0
        %v579 = vrcp.pop %v571
        %v580 = vmul.f32 1.0, %v579
        %v581 = vrcp.pop %v572
        %v582 = vmul.f32 1.0, %v581
        %v583 = vrcp.pop %v573
        %v584 = vmul.f32 1.0, %v583
        %v585 = vrcp.pop %v574
        %v586 = vmul.f32 1.0, %v585
        %v587 = vrcp.pop %v575
        %v588 = vmul.f32 1.0, %v587
        %v589 = vrcp.pop %v576
        %v590 = vmul.f32 1.0, %v589
        %v591 = vrcp.pop %v577
        %v592 = vmul.f32 1.0, %v591
        %v593 = vrcp.pop %v578
        %v594 = vmul.f32 1.0, %v593
        %v595 = vmax.f32 %v580, 1e-07
        %v596 = vmax.f32 %v582, 1e-07
        %v597 = vmax.f32 %v584, 1e-07
        %v598 = vmax.f32 %v586, 1e-07
        %v599 = vmin.f32 %v595, 0.9999999
        %v600 = vmin.f32 %v596, 0.9999999
        %v601 = vmin.f32 %v597, 0.9999999
        %v602 = vmin.f32 %v598, 0.9999999
        %v603 = vrot.slane %v599, 4
        %v604 = vadd.f32 %v599, %v603
        %v605 = vrot.slane %v604, 2
        %v606 = vadd.f32 %v604, %v605
        %v607 = vrot.slane %v606, 1
        %v608 = vadd.f32 %v606, %v607
        %v609 = vrot.slane %v600, 4
        %v610 = vadd.f32 %v600, %v609
        %v611 = vrot.slane %v610, 2
        %v612 = vadd.f32 %v610, %v611
        %v613 = vrot.slane %v612, 1
        %v614 = vadd.f32 %v612, %v613
        %v615 = vrot.slane %v601, 4
        %v616 = vadd.f32 %v601, %v615
        %v617 = vrot.slane %v616, 2
        %v618 = vadd.f32 %v616, %v617
        %v619 = vrot.slane %v618, 1
        %v620 = vadd.f32 %v618, %v619
        %v621 = vrot.slane %v602, 4
        %v622 = vadd.f32 %v602, %v621
        %v623 = vrot.slane %v622, 2
        %v624 = vadd.f32 %v622, %v623
        %v625 = vrot.slane %v624, 1
        %v626 = vadd.f32 %v624, %v625
        %v627 = vrcp.pop %v608
        %v628 = vrcp.pop %v614
        %v629 = vrcp.pop %v620
        %v630 = vrcp.pop %v626
        %v631 = vmul.f32 %v599, %v627
        %v632 = vmul.f32 %v600, %v628
        %v633 = vmul.f32 %v601, %v629
        %v634 = vmul.f32 %v602, %v630
        %v635 = vmul.f32 %v631, %v588
        %v636 = vmul.f32 %v632, %v590
        %v637 = vmul.f32 %v633, %v592
        %v638 = vmul.f32 %v634, %v594
        %v639 = vrot.slane %v635, 4
        %v640 = vadd.f32 %v635, %v639
        %v641 = vrot.slane %v640, 2
        %v642 = vadd.f32 %v640, %v641
        %v643 = vrot.slane %v642, 1
        %v644 = vadd.f32 %v642, %v643
        %v645 = vrot.slane %v636, 4
        %v646 = vadd.f32 %v636, %v645
        %v647 = vrot.slane %v646, 2
        %v648 = vadd.f32 %v646, %v647
        %v649 = vrot.slane %v648, 1
        %v650 = vadd.f32 %v648, %v649
        %v651 = vrot.slane %v637, 4
        %v652 = vadd.f32 %v637, %v651
        %v653 = vrot.slane %v652, 2
        %v654 = vadd.f32 %v652, %v653
        %v655 = vrot.slane %v654, 1
        %v656 = vadd.f32 %v654, %v655
        %v657 = vrot.slane %v638, 4
        %v658 = vadd.f32 %v638, %v657
        %v659 = vrot.slane %v658, 2
        %v660 = vadd.f32 %v658, %v659
        %v661 = vrot.slane %v660, 1
        %v662 = vadd.f32 %v660, %v661
        %v663 = vld [vmem:[%s3] sm:$0xf]
        %v665 = vlaneseq
        %v666 = vshrl.u32 %v665, 7
        %v667 = vsub.s32 0, %v666
        %v668 = vrot.slane %v663, %v667
        %v669 = vlaneseq
        %v670 = vshrl.u32 %v669, 7
        %v671 = vsub.s32 1, %v670
        %v672 = vrot.slane %v663, %v671
        %v673 = vlaneseq
        %v674 = vshrl.u32 %v673, 7
        %v675 = vsub.s32 2, %v674
        %v676 = vrot.slane %v663, %v675
        %v677 = vlaneseq
        %v678 = vshrl.u32 %v677, 7
        %v679 = vsub.s32 3, %v678
        %v680 = vrot.slane %v663, %v679
        %v685 = vmul.f32 %v644, %v668
        %v686 = vmul.f32 %v650, %v672
        %v687 = vmul.f32 %v656, %v676
        %v688 = vmul.f32 %v662, %v680
        %v689 = vadd.f32 %v685, %v686
        %v690 = vadd.f32 %v689, %v687
        %v691 = vadd.f32 %v690, %v688
        %692 = vst [vmem:[%s238] sm:$0x1] %v691
        %s693 = sand.u32 %s119, 1
        %s694 = scalar_lea.sflag [#allocation4], %s693
        %s695 = sand.u32 %s119, 1
        %s696 = scalar_lea.vmem [#allocation8], %s695
        // Predicated region
        $region49: #{tpu_custom_call.1} parent=35 // pred_check
          %p697 = pneg %p129
        $region50: #{tpu_custom_call.1} parent=35 // pred_check_branch
          %699 = sbr.rel (%p697) target = $region52
        $region51: #{tpu_custom_call.1} parent=35 // pred_region
          %s701 = ssub.s32 16, 16
          %702 = vsyncadd %s694, %s701
          %s703 = smul.addr %s22, 16
          %s704 = scalar_lea.hbm %s4, %s703
          %s706 = sshll.u32 %s696, 4
          %s707 = int_to_ptr.vmem [resolvable:$true] %s706
          %709 = dma.vmem_to_hbm [thread:$0]  %s707, 16, %s704, %s694
        $region52: #{tpu_custom_call.1} parent=35 // pred_fallthru
          _
      $region36: #{tpu_custom_call.1} parent=5 // pred_fallthru
        _
      %p710 = scmp.le.s32.totalorder 2, %s17
      // Predicated region
      $region53: #{tpu_custom_call.1} parent=5 // pred_check
        %p711 = pneg %p710
      $region54: #{tpu_custom_call.1} parent=5 // pred_check_branch
        %713 = sbr.rel (%p711) target = $region56
      $region55: #{tpu_custom_call.1} parent=5 // pred_region
        %s714 = ssub.s32 %s17, 2
        // Predicated region
        $region57: #{tpu_custom_call.1} parent=55 // pred_check
          %p715 = pneg %p135
        $region58: #{tpu_custom_call.1} parent=55 // pred_check_branch
          %717 = sbr.rel (%p715) target = $region60
        $region59: #{tpu_custom_call.1} parent=55 // pred_region
          %s718 = sand.u32 %s120, 1
          %s719 = scalar_lea.sflag [#allocation4], %s718
          %s720 = sand.u32 %s120, 1
          %s721 = scalar_lea.vmem [#allocation8], %s720
          %722 = dma.done %s719, 16
        $region60: #{tpu_custom_call.1} parent=55 // pred_fallthru
          _
      $region56: #{tpu_custom_call.1} parent=5 // pred_fallthru
        _
    $region6: #{tpu_custom_call.1} parent=1 // loop_footer
      %s21 = sadd.s32 1, %s17
    $region7: #{tpu_custom_call.1} parent=1 // loop_footer_branch
      %16 = sbr.rel target = $region3
    $region8: #{tpu_custom_call.1} parent=1 // loop_exit
      _
    %723 = vsyncpa [#allocation3], 1
    %s724 = scalar_lea.sflag [#allocation3], 1
    %725 = vsyncpa %s724, 1
    %726 = vsyncpa [#allocation6], 1
    %727 = vsyncpa [#allocation4], 1
    %s728 = scalar_lea.sflag [#allocation4], 1
    %729 = vsyncpa %s728, 1

</llo_original>
